<compile_context>
chip_gen: v7x
topology: tpu7x:2x2x1
jax: 0.10.0
libtpu: 0.0.40
codegen_flags: <defaults>
</compile_context>

<pallas_src>
import jax
import jax.numpy as jnp
from jax.experimental import pallas as pl
from jax.experimental.pallas import tpu as pltpu


def _relu6_kernel(x_ref, o_ref):
    x = x_ref[...]
    zero = jnp.asarray(0, dtype=x.dtype)
    six = jnp.asarray(6, dtype=x.dtype)
    o_ref[...] = jnp.minimum(jnp.maximum(x, zero), six)


def _sublane_for(itemsize):
    # dtype-native sublane tile (f32:8, bf16/f16:16, int8/fp8:32)
    return {4: 8, 2: 16, 1: 32}.get(itemsize, 8)


def _pick_tile_rows(rows, lane_width, itemsize, block_bytes, min_blocks=8):
    """Rows per block: as big as the byte budget allows, but >= min_blocks steps."""
    sublane = _sublane_for(itemsize)
    if rows <= sublane:
        # Full-dim block (allowed even when < native sublane tile).
        return rows
    # Largest block that fits the byte budget, in units of the native tile.
    budget_rows = max(sublane,
                      (block_bytes // (lane_width * itemsize)) // sublane * sublane)
    # ...but keep >= min_blocks grid steps so both v7x TensorCores get several
    # pipelined blocks each (grid=2 would leave each core one exposed DMA).
    cap_rows = max(sublane, pl.cdiv(pl.cdiv(rows, min_blocks), sublane) * sublane)
    return min(budget_rows, cap_rows)


def _run_slab(slab, tile_rows, in_place):
    rows, lane_width = slab.shape
    itemsize = jnp.dtype(slab.dtype).itemsize
    tile_bytes = tile_rows * lane_width * itemsize
    # 2 input + 2 output pipeline buffers must fit with headroom; stay under
    # v7x's 64 MiB physical VMEM.
    vmem_limit = int(min(56 * 1024 * 1024, max(48 * 1024 * 1024, 5 * tile_bytes)))
    grid = (pl.cdiv(rows, tile_rows),)   # partial last block handled by Pallas masking
    extra = {"input_output_aliases": {0: 0}} if in_place else {}
    return pl.pallas_call(
        _relu6_kernel,
        out_shape=jax.ShapeDtypeStruct(slab.shape, slab.dtype),
        grid_spec=pltpu.PrefetchScalarGridSpec(
            num_scalar_prefetch=0,
            grid=grid,
            in_specs=[pl.BlockSpec((tile_rows, lane_width), lambda i: (i, 0))],
            out_specs=pl.BlockSpec((tile_rows, lane_width), lambda i: (i, 0)),
        ),
        compiler_params=pltpu.CompilerParams(
            dimension_semantics=("parallel",),
            vmem_limit_bytes=vmem_limit,
        ),
        **extra,
    )(slab)


def relu6_pallas(
    x,
    *,
    block_bytes=6 * 1024 * 1024,   # ~6 MiB blocks: <7% step overhead even on v7x
    min_pallas_elems=1 << 16,      # below this, a fused XLA clamp is strictly cheaper
    in_place=False,                # opt-in aliasing; only with donated inputs
):
    """Elementwise ReLU6 via Pallas. Accepts any shape/dtype; returns same."""
    orig_shape = x.shape
    n = x.size

    # Tiny tensors: let XLA fuse the clamp; kernel launch overhead would dominate.
    if n == 0 or n < min_pallas_elems:
        return jnp.clip(x, 0, 6)

    itemsize = jnp.dtype(x.dtype).itemsize
    flat = jnp.ravel(x)

    if n % 128 == 0:
        # Zero-pad-free path: largest lane width (multiple of 128) dividing n,
        # so the reshape is a pure bitcast (no extra HBM pass).
        lane_width = next(lw for lw in (512, 256, 128) if n % lw == 0)
        rows = n // lane_width
        tile_rows = _pick_tile_rows(rows, lane_width, itemsize, block_bytes)
        out = _run_slab(flat.reshape(rows, lane_width), tile_rows, in_place)
        return out.reshape(orig_shape)

    # Misaligned size: Pallas on the 128-aligned prefix, plain clamp on the tail.
    lane_width = 128
    n_main = (n // lane_width) * lane_width
    if n_main == 0:
        return jnp.clip(x, 0, 6)
    rows = n_main // lane_width
    tile_rows = _pick_tile_rows(rows, lane_width, itemsize, block_bytes)
    head = _run_slab(flat[:n_main].reshape(rows, lane_width), tile_rows, in_place=False)
    tail = jnp.clip(flat[n_main:], 0, 6)
    return jnp.concatenate([head.reshape(-1), tail]).reshape(orig_shape)


if __name__ == "__main__":
    key = jax.random.PRNGKey(0)
    k1, k2, k3 = jax.random.split(key, 3)

    # 1) Typical small NCHW activation (batch=2, channels=4, 16x16); force the
    #    Pallas path so the kernel itself is exercised.
    x1 = jax.random.normal(k1, (2, 4, 16, 16), dtype=jnp.float32) * 5.0
    ref1 = jnp.clip(x1, 0.0, 6.0)
    y1 = jax.block_until_ready(relu6_pallas(x1, min_pallas_elems=0))
    assert y1.shape == x1.shape and y1.dtype == x1.dtype
    assert jnp.allclose(y1, ref1), "mismatch (small)"

    # 2) Larger activation: multi-block grid (~8 blocks), pipelined and shared
    #    across both v7x TensorCores.
    x2 = jax.random.normal(k2, (8, 64, 32, 32), dtype=jnp.float32) * 5.0
    ref2 = jnp.clip(x2, 0.0, 6.0)
    y2 = jax.block_until_ready(relu6_pallas(x2))
    assert y2.shape == x2.shape and y2.dtype == x2.dtype
    assert jnp.allclose(y2, ref2), "mismatch (big)"

    # 3) Size not divisible by 128: Pallas prefix + clamped tail path.
    x3 = jax.random.normal(k3, (3, 5, 7, 11), dtype=jnp.float32) * 5.0
    ref3 = jnp.clip(x3, 0.0, 6.0)
    y3 = jax.block_until_ready(relu6_pallas(x3, min_pallas_elems=0))
    assert y3.shape == x3.shape and y3.dtype == x3.dtype
    assert jnp.allclose(y3, ref3), "mismatch (misaligned)"

    # 4) Default small-input fast path (fused XLA clamp).
    y4 = jax.block_until_ready(relu6_pallas(x1))
    assert jnp.allclose(y4, ref1), "mismatch (fast path)"

    print("KERNEL_OK")
</pallas_src>

<mosaic_0001>
module attributes {stable_mosaic.version = 11 : i64} {
  func.func @_relu6_kernel(%arg0: i32, %arg1: memref<4x512xf32, #tpu.memory_space<vmem>>, %arg2: memref<4x512xf32, #tpu.memory_space<vmem>>) attributes {dimension_semantics = [#tpu.dimension_semantics<parallel>], iteration_bounds = array<i64: 1>, scalar_prefetch = 0 : i64, scratch_operands = 0 : i64, tpu.core_type = #tpu.core_type<tc>, window_params = [{transform_indices = @transform_0, window_bounds = array<i64: 4, 512>}, {transform_indices = @transform_1, window_bounds = array<i64: 4, 512>}]} {
    %c0 = arith.constant 0 : index
    %c0_0 = arith.constant 0 : index
    %0 = vector.load %arg1[%c0, %c0_0] : memref<4x512xf32, #tpu.memory_space<vmem>>, vector<4x512xf32>
    %cst = arith.constant 0.000000e+00 : f32
    %1 = vector.broadcast %cst : f32 to vector<4x512xf32>
    %2 = arith.maximumf %0, %1 : vector<4x512xf32>
    %cst_1 = arith.constant 6.000000e+00 : f32
    %3 = vector.broadcast %cst_1 : f32 to vector<4x512xf32>
    %4 = arith.minimumf %2, %3 : vector<4x512xf32>
    %c0_2 = arith.constant 0 : index
    %c0_3 = arith.constant 0 : index
    %5 = vector.load %arg2[%c0_2, %c0_3] : memref<4x512xf32, #tpu.memory_space<vmem>>, vector<4x512xf32>
    tpu.vector_store %arg2[%c0_2, %c0_3], %4 {strides = array<i32>} : memref<4x512xf32, #tpu.memory_space<vmem>>, vector<4x512xf32>,
    return
  }
  func.func @transform_0(%arg0: i32) -> (i32, i32) {
    %c0_i32 = arith.constant 0 : i32
    %c0_i32_0 = arith.constant 0 : i32
    return %arg0, %c0_i32 : i32, i32
  }
  func.func @transform_1(%arg0: i32) -> (i32, i32) {
    %c0_i32 = arith.constant 0 : i32
    %c0_i32_0 = arith.constant 0 : i32
    return %arg0, %c0_i32 : i32, i32
  }
}

</mosaic_0001>

<llo_original>
// kernel: tpu_custom_call.1
$region0: #{tpu_custom_call.1}
  #allocation0 [shape = 'u32[]', space=smem, size = 0x4, offset = 0x4, fixed_abs, tag = 'smem constant byte address 0x4 - core index']
  #allocation1 [shape = 'u32[144,128]{1,0:T(1,128)}', space=vmem, size = 0x12000, scoped, tag = 'internal scratch']
  %s0 = inlined_call_operand.hbm [shape: f32[4,512], index: 0, kind: input, shape index: {}]
  %s1 = inlined_call_operand.hbm [shape: f32[4,512], index: 1, kind: output, shape index: {}]
  %s2 = sld [smem:[#allocation0]]
  $region18: #{tpu_custom_call.1} parent=0
    _
  %s4 = ssub.s32 1, %s2
  %s5 = scalar_select 0, %s4, %s2
  $region1: #{tpu_custom_call.1} parent=0
    #allocation2 [shape = 'u8[8192]{0}', space=vmem, size = 0x2000, scoped, tag = 'input window, operand 0, single buffered']
    #allocation3 [shape = 's32[1]{0}', space=sflag, size = 0x4, scoped, tag = 'scoped memory for tpu_custom_call.1']
    #allocation4 [shape = 's32[1]{0}', space=sflag, size = 0x4, scoped, tag = 'scoped memory for tpu_custom_call.1']
    #allocation5 [shape = 'u8[8192]{0}', space=vmem, size = 0x2000, scoped, tag = 'output window, operand 0, single buffered']
    %6 = vsyncpa [#allocation3], 0
    %7 = vsyncpa [#allocation4], 0
    // Predicated region
    $region2: #{tpu_custom_call.1} parent=1 // pred_check
      _
    $region3: #{tpu_custom_call.1} parent=1 // pred_check_branch
      %9 = sbr.rel (0) target = $region5
    $region4: #{tpu_custom_call.1} parent=1 // pred_region
      %s11 = ssub.s32 256, 256
      %12 = vsyncadd [#allocation3], %s11
      %s14 = sshll.u32 [#allocation2], 4
      %s15 = int_to_ptr.vmem [resolvable:$true] %s14
      %17 = dma.hbm_to_vmem [thread:$0]  %s0, 256, %s15, [#allocation3]
    $region5: #{tpu_custom_call.1} parent=1 // pred_fallthru
      _
    // Predicated region
    $region6: #{tpu_custom_call.1} parent=1 // pred_check
      _
    $region7: #{tpu_custom_call.1} parent=1 // pred_check_branch
      %19 = sbr.rel (0) target = $region9
    $region8: #{tpu_custom_call.1} parent=1 // pred_region
      %20 = dma.done [#allocation3], 256
    $region9: #{tpu_custom_call.1} parent=1 // pred_fallthru
      _
    %v21 = vld [vmem:[#allocation2] sm:$0xff]
    %v22 = vld [vmem:[#allocation2 + $0x8] sm:$0xff]
    %v23 = vmax.f32 %v21, 0.0
    %v24 = vmax.f32 %v22, 0.0
    %v25 = vmin.f32 %v23, 6.0
    %v26 = vmin.f32 %v24, 6.0
    %27 = vst [vmem:[#allocation5] sm:$0xff] %v25
    %28 = vst [vmem:[#allocation5 + $0x8] sm:$0xff] %v26
    // Predicated region
    $region10: #{tpu_custom_call.1} parent=1 // pred_check
      _
    $region11: #{tpu_custom_call.1} parent=1 // pred_check_branch
      %30 = sbr.rel (0) target = $region13
    $region12: #{tpu_custom_call.1} parent=1 // pred_region
      %s32 = ssub.s32 256, 256
      %33 = vsyncadd [#allocation4], %s32
      %s35 = sshll.u32 [#allocation5], 4
      %s36 = int_to_ptr.vmem [resolvable:$true] %s35
      %38 = dma.vmem_to_hbm [thread:$0]  %s36, 256, %s1, [#allocation4]
    $region13: #{tpu_custom_call.1} parent=1 // pred_fallthru
      _
    // Predicated region
    $region14: #{tpu_custom_call.1} parent=1 // pred_check
      _
    $region15: #{tpu_custom_call.1} parent=1 // pred_check_branch
      %40 = sbr.rel (0) target = $region17
    $region16: #{tpu_custom_call.1} parent=1 // pred_region
      %41 = dma.done [#allocation4], 256
    $region17: #{tpu_custom_call.1} parent=1 // pred_fallthru
      _
    %42 = vsyncpa [#allocation3], 1
    %43 = vsyncpa [#allocation4], 1

</llo_original>
